<compile_context>
chip_gen: v5e
topology: v5e:2x2
jax: 0.10.0
libtpu: 0.0.40
codegen_flags: <defaults>
</compile_context>

<pallas_src>
import functools

import jax
import jax.numpy as jnp
from jax.experimental import pallas as pl
from jax.experimental.pallas import tpu as pltpu


_SQRT_2_OVER_PI = 0.7978845608028654


def _gelu_tanh(y):
    # TODO(synk): PyTorch nn.GELU defaults to the exact erf form; erf lowering
    # is not guaranteed in Mosaic, so the standard tanh approximation is used
    # both in-kernel and in the reference (max deviation ~1e-3).
    return 0.5 * y * (1.0 + jnp.tanh(_SQRT_2_OVER_PI * (y + 0.044715 * y * y * y)))


def _pick_block(dim: int, target: int, align: int) -> int:
    """Largest `align`-multiple divisor of `dim` that is <= target.

    Full-extent blocks are only used when dim <= target (always legal and
    small); for larger dims we never silently fall back to the whole
    dimension (VMEM blowup hazard).
    """
    if dim <= target:
        return dim
    d = (target // align) * align
    while d >= align:
        if dim % d == 0:
            return d
        d -= align
    if dim <= 4 * target:  # modest, still VMEM-safe
        return dim
    raise ValueError(
        f"dim={dim} has no {align}-aligned divisor <= {target}; pad the dimension."
    )


def _epilogue(y_f32, b_ref, *, apply_gelu, normalize, eps):
    if b_ref is not None:
        y_f32 = y_f32 + b_ref[...].astype(jnp.float32)
    if apply_gelu:
        y_f32 = _gelu_tanh(y_f32)
    if normalize:
        # F.normalize(p=2, dim=-1): rsqrt(sum(x^2) + eps^2) * x.
        # (rsqrt goes to the EUP slot; one broadcast multiply on the VPU.)
        sumsq = jnp.sum(y_f32 * y_f32, axis=-1, keepdims=True)
        y_f32 = y_f32 * jax.lax.rsqrt(sumsq + eps * eps)
    return y_f32


# -----------------------------------------------------------------------------
# Fused Linear kernels: y = x @ w_t [+ b] [-> GELU] [-> L2 normalize rows]
# Single-K variant (whole K in one block, no accumulator) and multi-K variant
# (f32 VMEM accumulator, reduction axis last).
# -----------------------------------------------------------------------------
def _linear_single_k_kernel(*refs, apply_gelu, has_bias, normalize, eps):
    if has_bias:
        x_ref, w_ref, b_ref, o_ref = refs
    else:
        x_ref, w_ref, o_ref = refs
        b_ref = None
    y = jnp.dot(x_ref[...], w_ref[...], preferred_element_type=jnp.float32)
    y = _epilogue(y, b_ref, apply_gelu=apply_gelu, normalize=normalize, eps=eps)
    o_ref[...] = y.astype(o_ref.dtype)


def _linear_multi_k_kernel(*refs, apply_gelu, has_bias, normalize, eps):
    if has_bias:
        x_ref, w_ref, b_ref, o_ref, acc_ref = refs
    else:
        x_ref, w_ref, o_ref, acc_ref = refs
        b_ref = None

    @pl.when(pl.program_id(2) == 0)
    def _():
        acc_ref[...] = jnp.zeros_like(acc_ref)

    acc_ref[...] += jnp.dot(
        x_ref[...], w_ref[...], preferred_element_type=jnp.float32
    )

    @pl.when(pl.program_id(2) == pl.num_programs(2) - 1)
    def _():
        y = _epilogue(acc_ref[...], b_ref, apply_gelu=apply_gelu,
                      normalize=normalize, eps=eps)
        o_ref[...] = y.astype(o_ref.dtype)


def linear_pallas(x, w_t, b=None, *, apply_gelu=False, normalize=False,
                  eps=1e-12, out_dtype=None, tm=256, tn=512, tk=2048,
                  weight_buffers=2, vmem_limit_bytes=48 * 1024 * 1024):
    """y = x @ w_t (+ b) with optional fused GELU / row-L2-normalize epilogue.

    w_t is stored (in, out).  bf16 operands are fed straight to the MXU; the
    accumulation is always f32.
    """
    M, K = x.shape
    K2, N = w_t.shape
    assert K == K2
    has_bias = b is not None
    if has_bias:
        assert b.shape == (N,)
    if out_dtype is None:
        out_dtype = x.dtype

    bm = _pick_block(M, tm, 8)
    # Fused L2-normalize needs the whole output row resident in one tile.
    bn = N if normalize else _pick_block(N, tn, 128)
    bk = _pick_block(K, tk, 128)
    nm, nn, nk = M // bm, N // bn, K // bk
    multi_k = nk > 1

    kern_kwargs = dict(apply_gelu=apply_gelu, has_bias=has_bias,
                       normalize=normalize, eps=eps)

    if multi_k:
        grid = (nm, nn, nk)
        x_spec = pl.BlockSpec((bm, bk), lambda i, j, k: (i, k))
        w_block, w_index = (bk, bn), (lambda i, j, k: (k, j))
        b_spec = pl.BlockSpec((1, bn), lambda i, j, k: (0, j))
        out_spec = pl.BlockSpec((bm, bn), lambda i, j, k: (i, j))
        scratch = [pltpu.VMEM((bm, bn), jnp.float32)]
        semantics = ("parallel", "parallel", "arbitrary")
        kernel = functools.partial(_linear_multi_k_kernel, **kern_kwargs)
        n_w_tiles = nn * nk
    else:
        grid = (nm, nn)
        x_spec = pl.BlockSpec((bm, K), lambda i, j: (i, 0))
        w_block, w_index = (K, bn), (lambda i, j: (0, j))
        b_spec = pl.BlockSpec((1, bn), lambda i, j: (0, j))
        out_spec = pl.BlockSpec((bm, bn), lambda i, j: (i, j))
        scratch = []
        semantics = ("parallel", "parallel")
        kernel = functools.partial(_linear_single_k_kernel, **kern_kwargs)
        n_w_tiles = nn

    # Deeper buffering on the weight stream (final 65536-wide layer) only when
    # there are enough distinct weight tiles to make it meaningful.
    if weight_buffers > 2 and n_w_tiles >= weight_buffers:
        w_spec = pl.BlockSpec(w_block, w_index,
                              pipeline_mode=pl.Buffered(weight_buffers))
    else:
        w_spec = pl.BlockSpec(w_block, w_index)

    in_specs = [x_spec, w_spec]
    args = [x, w_t]
    if has_bias:
        in_specs.append(b_spec)
        args.append(b.reshape(1, N))

    return pl.pallas_call(
        kernel,
        out_shape=jax.ShapeDtypeStruct((M, N), out_dtype),
        grid_spec=pltpu.PrefetchScalarGridSpec(
            num_scalar_prefetch=0,
            grid=grid,
            in_specs=in_specs,
            out_specs=out_spec,
            scratch_shapes=scratch,
        ),
        compiler_params=pltpu.CompilerParams(
            dimension_semantics=semantics,
            vmem_limit_bytes=vmem_limit_bytes,
        ),
    )(*args)


# -----------------------------------------------------------------------------
# Module wrapper (forward only), mirroring the PyTorch DINOHead.
# -----------------------------------------------------------------------------
class DINOHeadPallas:
    def __init__(self, in_channels, out_channels, proj_hidden_dim=2048,
                 bottleneck_dim=512, n_layers=3, norm_last_layer=True,
                 *, key, param_dtype=jnp.bfloat16, out_dtype=jnp.float32):
        # norm_last_layer only controls weight_g trainability; forward is
        # identical since weight_g == 1.
        del norm_last_layer
        self.param_dtype = param_dtype
        self.out_dtype = out_dtype

        if n_layers == 1:
            layer_dims = [(in_channels, bottleneck_dim)]
        else:
            layer_dims = [(in_channels, proj_hidden_dim)]
            layer_dims += [(proj_hidden_dim, proj_hidden_dim)] * (n_layers - 2)
            layer_dims += [(proj_hidden_dim, bottleneck_dim)]
        keys = jax.random.split(key, len(layer_dims) + 1)

        # MLP params: weights stored transposed (in, out), std=0.02, zero bias,
        # kept in bf16 so the MXU sees native-rate operands.
        self.mlp_params = []
        for k, (din, dout) in zip(keys[:-1], layer_dims):
            w_t = (0.02 * jax.random.normal(k, (din, dout))).astype(param_dtype)
            b = jnp.zeros((dout,), param_dtype)
            self.mlp_params.append((w_t, b))

        # weight_norm(Linear(bottleneck, out, bias=False)) with weight_g == 1:
        # effective weight rows are v / ||v||; fold host-side once (f32 math),
        # then store bf16.
        v = 0.02 * jax.random.normal(keys[-1], (out_channels, bottleneck_dim))
        g = jnp.ones((out_channels, 1))
        w_eff = g * v / jnp.linalg.norm(v, axis=1, keepdims=True)
        self.w_last_t = w_eff.T.astype(param_dtype)              # (bottleneck, out)

    def __call__(self, x):
        h = x.astype(self.param_dtype)
        n = len(self.mlp_params)
        for idx, (w_t, b) in enumerate(self.mlp_params):
            is_last_mlp = idx == n - 1
            # Last MLP layer: no GELU, fuse the row-wise L2 normalization into
            # its epilogue (full bottleneck row resides in one output tile).
            h = linear_pallas(h, w_t, b,
                              apply_gelu=not is_last_mlp,
                              normalize=is_last_mlp)
        # Final weight-normalized layer: plain bias-free tiled matmul.
        return linear_pallas(h, self.w_last_t, None,
                             apply_gelu=False, normalize=False,
                             out_dtype=self.out_dtype, weight_buffers=3)

    # Pure-jnp f32 reference (same bf16 params, same GELU approximation, same
    # rsqrt-based normalize) for correctness checking.
    def reference(self, x):
        hp = jax.lax.Precision.HIGHEST
        h = x.astype(jnp.float32)
        n = len(self.mlp_params)
        for idx, (w_t, b) in enumerate(self.mlp_params):
            h = jnp.dot(h, w_t.astype(jnp.float32), precision=hp) + b.astype(jnp.float32)
            if idx < n - 1:
                h = _gelu_tanh(h)
        sumsq = jnp.sum(h * h, axis=-1, keepdims=True)
        h = h * jax.lax.rsqrt(sumsq + 1e-24)
        return jnp.dot(h, self.w_last_t.astype(jnp.float32),
                       precision=hp).astype(self.out_dtype)


if __name__ == "__main__":
    root = jax.random.PRNGKey(0)
    k_params, k_x = jax.random.split(root)

    # Small shapes consistent with DINOHead's (batch, in_channels) input.
    batch, in_channels = 8, 32
    proj_hidden_dim, bottleneck_dim = 64, 32
    out_channels, n_layers = 48, 3

    head = DINOHeadPallas(
        in_channels, out_channels,
        proj_hidden_dim=proj_hidden_dim,
        bottleneck_dim=bottleneck_dim,
        n_layers=n_layers,
        norm_last_layer=True,
        key=k_params,
    )

    x = jax.random.normal(k_x, (batch, in_channels), dtype=jnp.float32)

    y = jax.block_until_ready(head(x))
    y_ref = jax.block_until_ready(head.reference(x))

    assert y.shape == (batch, out_channels)
    assert y.dtype == jnp.float32
    # bf16 activations/weights vs f32 reference: tolerance reflects bf16 rounding.
    assert jnp.allclose(y, y_ref, atol=2e-2, rtol=2e-2), "mismatch vs reference"

    print("KERNEL_OK")
</pallas_src>

<mosaic_0001>
module attributes {stable_mosaic.version = 11 : i64} {
  func.func @_linear_single_k_kernel(%arg0: i32, %arg1: i32, %arg2: memref<8x32xbf16, #tpu.memory_space<vmem>>, %arg3: memref<32x64xbf16, #tpu.memory_space<vmem>>, %arg4: memref<1x64xbf16, #tpu.memory_space<vmem>>, %arg5: memref<8x64xbf16, #tpu.memory_space<vmem>>) attributes {dimension_semantics = [#tpu.dimension_semantics<parallel>, #tpu.dimension_semantics<parallel>], iteration_bounds = array<i64: 1, 1>, scalar_prefetch = 0 : i64, scratch_operands = 0 : i64, tpu.core_type = #tpu.core_type<tc>, window_params = [{transform_indices = @transform_0, window_bounds = array<i64: 8, 32>}, {transform_indices = @transform_1, window_bounds = array<i64: 32, 64>}, {transform_indices = @transform_2, window_bounds = array<i64: 1, 64>}, {transform_indices = @transform_3, window_bounds = array<i64: 8, 64>}]} {
    %c0 = arith.constant 0 : index
    %c0_0 = arith.constant 0 : index
    %0 = vector.load %arg2[%c0, %c0_0] : memref<8x32xbf16, #tpu.memory_space<vmem>>, vector<8x32xbf16>
    %c0_1 = arith.constant 0 : index
    %c0_2 = arith.constant 0 : index
    %1 = vector.load %arg3[%c0_1, %c0_2] : memref<32x64xbf16, #tpu.memory_space<vmem>>, vector<32x64xbf16>
    %cst = arith.constant dense<0.000000e+00> : vector<8x64xf32>
    %2 = tpu.matmul %0, %1, %cst {dimension_numbers = #tpu.dot_dimension_numbers<[1], [0], [0], [1], [0, 0, 1, 1], [], []>} : vector<8x32xbf16>, vector<32x64xbf16>, vector<8x64xf32> -> vector<8x64xf32>
    %c0_3 = arith.constant 0 : index
    %c0_4 = arith.constant 0 : index
    %3 = vector.load %arg4[%c0_3, %c0_4] : memref<1x64xbf16, #tpu.memory_space<vmem>>, vector<1x64xbf16>
    %4 = arith.extf %3 : vector<1x64xbf16> to vector<1x64xf32>
    %5 = vector.broadcast %4 : vector<1x64xf32> to vector<8x64xf32>
    %6 = arith.addf %2, %5 : vector<8x64xf32>
    %cst_5 = arith.constant 5.000000e-01 : f32
    %7 = vector.broadcast %cst_5 : f32 to vector<8x64xf32>
    %8 = arith.mulf %7, %6 : vector<8x64xf32>
    %cst_6 = arith.constant 4.471500e-02 : f32
    %9 = vector.broadcast %cst_6 : f32 to vector<8x64xf32>
    %10 = arith.mulf %9, %6 : vector<8x64xf32>
    %11 = arith.mulf %10, %6 : vector<8x64xf32>
    %12 = arith.mulf %11, %6 : vector<8x64xf32>
    %13 = arith.addf %6, %12 : vector<8x64xf32>
    %cst_7 = arith.constant 0.797884583 : f32
    %14 = vector.broadcast %cst_7 : f32 to vector<8x64xf32>
    %15 = arith.mulf %14, %13 : vector<8x64xf32>
    %16 = math.tanh %15 : vector<8x64xf32>
    %cst_8 = arith.constant 1.000000e+00 : f32
    %17 = vector.broadcast %cst_8 : f32 to vector<8x64xf32>
    %18 = arith.addf %17, %16 : vector<8x64xf32>
    %19 = arith.mulf %8, %18 : vector<8x64xf32>
    %20 = arith.truncf %19 : vector<8x64xf32> to vector<8x64xbf16>
    %c0_9 = arith.constant 0 : index
    %c0_10 = arith.constant 0 : index
    %21 = vector.load %arg5[%c0_9, %c0_10] : memref<8x64xbf16, #tpu.memory_space<vmem>>, vector<8x64xbf16>
    tpu.vector_store %arg5[%c0_9, %c0_10], %20 {strides = array<i32>} : memref<8x64xbf16, #tpu.memory_space<vmem>>, vector<8x64xbf16>,
    return
  }
  func.func @transform_0(%arg0: i32, %arg1: i32) -> (i32, i32) {
    %c0_i32 = arith.constant 0 : i32
    %c0_i32_0 = arith.constant 0 : i32
    return %arg0, %c0_i32 : i32, i32
  }
  func.func @transform_1(%arg0: i32, %arg1: i32) -> (i32, i32) {
    %c0_i32 = arith.constant 0 : i32
    %c0_i32_0 = arith.constant 0 : i32
    return %c0_i32, %arg1 : i32, i32
  }
  func.func @transform_2(%arg0: i32, %arg1: i32) -> (i32, i32) {
    %c0_i32 = arith.constant 0 : i32
    %c0_i32_0 = arith.constant 0 : i32
    return %c0_i32, %arg1 : i32, i32
  }
  func.func @transform_3(%arg0: i32, %arg1: i32) -> (i32, i32) {
    %c0_i32 = arith.constant 0 : i32
    return %arg0, %arg1 : i32, i32
  }
}

</mosaic_0001>

<llo_original>
// kernel: tpu_custom_call.1
$region0: #{tpu_custom_call.1}
  #allocation0 [shape = 'u32[]', space=smem, size = 0x4, offset = 0x4, fixed_abs, tag = 'smem constant byte address 0x4 - core index']
  #allocation1 [shape = 'u32[72,128]{1,0:T(1,128)}', space=vmem, size = 0x9000, scoped, tag = 'internal scratch']
  %s0 = inlined_call_operand.hbm [shape: bf16[8,32], index: 0, kind: input, shape index: {}]
  %s1 = inlined_call_operand.hbm [shape: bf16[32,64], index: 1, kind: input, shape index: {}]
  %s2 = inlined_call_operand.vmem [shape: bf16[1,64], index: 2, kind: input, shape index: {}]
  %s3 = inlined_call_operand.hbm [shape: bf16[8,64], index: 3, kind: output, shape index: {}]
  %s4 = sld [smem:[#allocation0]]
  $region30: #{tpu_custom_call.1} parent=0
    _
  %s6 = ssub.s32 1, %s4
  %s7 = scalar_select 0, %s6, %s4
  $region1: #{tpu_custom_call.1} parent=0
    #allocation2 [shape = 'u8[2048]{0}', space=vmem, size = 0x800, scoped, tag = 'input window, operand 0, single buffered']
    #allocation3 [shape = 's32[1]{0}', space=sflag, size = 0x4, scoped, tag = 'scoped memory for tpu_custom_call.1']
    #allocation4 [shape = 's32[1]{0}', space=sflag, size = 0x4, scoped, tag = 'scoped memory for tpu_custom_call.1']
    #allocation5 [shape = 'u8[8192]{0}', space=vmem, size = 0x2000, scoped, tag = 'input window, operand 1, single buffered']
    #allocation6 [shape = 's32[1]{0}', space=sflag, size = 0x4, scoped, tag = 'scoped memory for tpu_custom_call.1']
    #allocation7 [shape = 'u8[2048]{0}', space=vmem, size = 0x800, scoped, tag = 'output window, operand 0, single buffered']
    %8 = vsyncpa [#allocation3], 0
    %9 = vsyncpa [#allocation6], 0
    %10 = vsyncpa [#allocation4], 0
    // Predicated region
    $region2: #{tpu_custom_call.1} parent=1 // pred_check
      _
    $region3: #{tpu_custom_call.1} parent=1 // pred_check_branch
      %12 = sbr.rel (0) target = $region5
    $region4: #{tpu_custom_call.1} parent=1 // pred_region
      %14 = vsyncadd [#allocation3], 0
      %s16 = sshll.u32 %s0, 4
      %s17 = int_to_ptr.hbm [resolvable:$true] %s16
      %s18 = sshll.u32 [#allocation2], 4
      %s19 = int_to_ptr.vmem [resolvable:$true] %s18
      %21 = dma.hbm_to_vmem [thread:$0]  %s17, 64, %s19, [#allocation3]
    $region5: #{tpu_custom_call.1} parent=1 // pred_fallthru
      _
    // Predicated region
    $region6: #{tpu_custom_call.1} parent=1 // pred_check
      _
    $region7: #{tpu_custom_call.1} parent=1 // pred_check_branch
      %23 = sbr.rel (0) target = $region9
    $region8: #{tpu_custom_call.1} parent=1 // pred_region
      %25 = vsyncadd [#allocation6], 0
      %s26 = sshll.u32 %s1, 4
      %s27 = int_to_ptr.hbm [resolvable:$true] %s26
      %s28 = sshll.u32 [#allocation5], 4
      %s29 = int_to_ptr.vmem [resolvable:$true] %s28
      %34 = dma.hbm_to_vmem [thread:$0]  %s27, 256, %s29, [#allocation6], 64, 64, 4
    $region9: #{tpu_custom_call.1} parent=1 // pred_fallthru
      _
    // Predicated region
    $region10: #{tpu_custom_call.1} parent=1 // pred_check
      _
    $region11: #{tpu_custom_call.1} parent=1 // pred_check_branch
      %36 = sbr.rel (0) target = $region13
    $region12: #{tpu_custom_call.1} parent=1 // pred_region
      _
    $region13: #{tpu_custom_call.1} parent=1 // pred_fallthru
      _
    // Predicated region
    $region14: #{tpu_custom_call.1} parent=1 // pred_check
      _
    $region15: #{tpu_custom_call.1} parent=1 // pred_check_branch
      %38 = sbr.rel (0) target = $region17
    $region16: #{tpu_custom_call.1} parent=1 // pred_region
      %40 = dma.done [#allocation3], 64
    $region17: #{tpu_custom_call.1} parent=1 // pred_fallthru
      _
    // Predicated region
    $region18: #{tpu_custom_call.1} parent=1 // pred_check
      _
    $region19: #{tpu_custom_call.1} parent=1 // pred_check_branch
      %42 = sbr.rel (0) target = $region21
    $region20: #{tpu_custom_call.1} parent=1 // pred_region
      %44 = dma.done [#allocation6], 256
    $region21: #{tpu_custom_call.1} parent=1 // pred_fallthru
      _
    %v46 = vld [vmem:[#allocation2] sm:$0xf]
    %v47 = vld [vmem:[#allocation5] sm:$0xf]
    %v48 = vld [vmem:[#allocation5 + $0x4] sm:$0xf]
    %v49 = vld [vmem:[#allocation5 + $0x8] sm:$0xf]
    %v50 = vld [vmem:[#allocation5 + $0xc] sm:$0xf]
    %v51 = vld [vmem:[%s2] sm:$0x1]
    %v52 = vunpack.c.l.bf16 %v51
    %v53 = vperm.slane %v52, 0
    %v58 = vunpack.c.l.b16 %v47
    %v59 = vunpack.c.l.b16 %v48
    %v60 = vunpack.c.l.b16 %v49
    %v61 = vunpack.c.l.b16 %v50
    %v62 = vpack.c.b16 %v59, %v58
    %v63 = vpack.c.b16 %v61, %v60
    %vm66 = vcmask 261120
    %v68 = vsel %vm66, %v46, 0
    %70 = vmatpush.bf16.msra.mxu0 0
    %71 = vmatpush.bf16.msra.mxu0 0
    %72 = vmatpush.bf16.msra.mxu0 0
    %73 = vmatpush.bf16.msra.mxu0 0
    %74 = vmatpush.bf16.msra.mxu0 0
    %75 = vmatpush.bf16.msra.mxu0 0
    %76 = vmatpush.bf16.msra.mxu0 %v63
    %77 = vmatpush.bf16.msra.mxu0 %v62
    %78 = vmatmul.bf16.gmra.mxu0 %v68
    %v79 = vpop.f32.mrf.mxu0
    %v80 = vadd.f32 %v53, %v79
    %v81 = vpop.f32.mrf.mxu0
    %82 = vdwg.mxu0
    %v83 = vmul.f32 %v80, 0.5
    %v84 = vmul.f32 %v80, 0.044715
    %v85 = vmul.f32 %v84, %v80
    %v86 = vmul.f32 %v85, %v80
    %v87 = vadd.f32 %v80, %v86
    %v88 = vmul.f32 %v87, 0.7978846
    %v89 = vtanh.pop %v88
    %v90 = vadd.f32 %v89, 1.0
    %v91 = vmul.f32 %v83, %v90
    %v92 = vpack.c.bf16 %v91, %v91
    %vm93 = vcmask 519168
    %94 = vst.msk [vmem:[#allocation7] sm:$0xf] %vm93, %v92
    // Predicated region
    $region22: #{tpu_custom_call.1} parent=1 // pred_check
      _
    $region23: #{tpu_custom_call.1} parent=1 // pred_check_branch
      %96 = sbr.rel (0) target = $region25
    $region24: #{tpu_custom_call.1} parent=1 // pred_region
      %98 = vsyncadd [#allocation4], 0
      %s100 = sshll.u32 [#allocation7], 4
      %s101 = int_to_ptr.vmem [resolvable:$true] %s100
      %s102 = sshll.u32 %s3, 4
      %s103 = int_to_ptr.hbm [resolvable:$true] %s102
      %105 = dma.vmem_to_hbm [thread:$0]  %s101, 64, %s103, [#allocation4]
    $region25: #{tpu_custom_call.1} parent=1 // pred_fallthru
      _
    // Predicated region
    $region26: #{tpu_custom_call.1} parent=1 // pred_check
      _
    $region27: #{tpu_custom_call.1} parent=1 // pred_check_branch
      %107 = sbr.rel (0) target = $region29
    $region28: #{tpu_custom_call.1} parent=1 // pred_region
      %109 = dma.done [#allocation4], 64
    $region29: #{tpu_custom_call.1} parent=1 // pred_fallthru
      _
    %110 = vsyncpa [#allocation3], 1
    %111 = vsyncpa [#allocation6], 1
    %112 = vsyncpa [#allocation4], 1

</llo_original>
